<compile_context>
chip_gen: v5e
topology: v5e:2x2
jax: 0.10.0
libtpu: 0.0.40
codegen_flags: <defaults>
</compile_context>

<pallas_src>
import jax
import jax.numpy as jnp
from jax.experimental import pallas as pl
from jax.experimental.pallas import tpu as pltpu


# ----------------------------------------------------------------------------
# Pallas kernel: fully-folded epsilon = channel-mix(x) + bias   (per pixel tile)
# ----------------------------------------------------------------------------
def vp_eps_kernel(coeff_ref, bias_ref, x_ref, out_ref):
    # coeff_ref : SMEM f32[C, C]   folded channel-mix coefficients
    # bias_ref  : SMEM f32[C]      folded bias
    # x_ref/out_ref : VMEM (1, C, TP) blocks, pixels on the lane axis.
    C = x_ref.shape[1]
    x = x_ref[0].astype(jnp.float32)          # (C, TP), lane-dense

    rows = []
    for d in range(C):                        # unrolled: C*C VPU FMAs, no MXU
        acc = x[0:1, :] * coeff_ref[0, d]
        for c in range(1, C):
            acc = acc + x[c:c+1, :] * coeff_ref[c, d]
        rows.append(acc + bias_ref[d])

    out = jnp.concatenate(rows, axis=0)       # (C, TP)
    out_ref[0] = out.astype(out_ref.dtype)


# ----------------------------------------------------------------------------
# Wrapper
# ----------------------------------------------------------------------------
def vp_epsilon_from_denoiser(x_nchw, t, alphas_cumprod, w, b,
                             sigma_data=0.5, max_tile_pixels=8192):
    """x_nchw: [N, C, H, W]; t: python int or scalar array; returns eps [N, C, H, W]."""
    N, C, H, W = x_nchw.shape
    HW = H * W
    dtype = x_nchw.dtype

    # ---- timestep glue (matches PyTorch int / float-round branches) ----
    t_idx = jnp.asarray(t)
    if jnp.issubdtype(t_idx.dtype, jnp.floating):
        t_idx = jnp.round(t_idx)
    t_idx = t_idx.reshape(()).astype(jnp.int32)

    # ---- scalar schedule math (f32; PyTorch uses f64 for this part) ----
    alpha_t = alphas_cumprod.astype(jnp.float32)[t_idx]
    eq_sigma = jnp.sqrt((1.0 - alpha_t) / alpha_t)
    inv_sqrt_alpha = 1.0 / jnp.sqrt(alpha_t)
    inv_sigma = 1.0 / eq_sigma        # +inf if alpha_t == 1.0 exactly (matches torch)

    # EDM-style preconditioning scalars of the synthetic base denoiser
    s2 = eq_sigma * eq_sigma
    d2 = jnp.float32(sigma_data * sigma_data)
    c_skip = d2 / (s2 + d2)
    c_out = eq_sigma * jnp.float32(sigma_data) / jnp.sqrt(s2 + d2)
    c_in = 1.0 / jnp.sqrt(s2 + d2)

    # ---- fold everything into one CxC channel mix + bias (wrapper side) ----
    #   eps[d, p] = sum_c coeff[c, d] * x[c, p] + bias2[d]
    a_diag = inv_sigma * (1.0 - c_skip) * inv_sqrt_alpha
    w_scale = -inv_sigma * c_out * c_in * inv_sqrt_alpha
    coeff = w_scale * w.astype(jnp.float32) + a_diag * jnp.eye(C, dtype=jnp.float32)
    bias2 = (-inv_sigma * c_out) * b.astype(jnp.float32)

    # ---- layout: native NCHW -> (N, C, H*W); pure reshape, zero HBM traffic ----
    x3 = x_nchw.reshape(N, C, HW)

    # Pixel tiling: whole image if it fits, else 128-aligned tiles (cdiv grid,
    # the padded tail is per-pixel math so OOB padding cannot contaminate valid
    # outputs). Block bytes ~= C * tile_p * 4 per buffer -> tiny even on v7x's
    # 64 MiB VMEM at C=4; shrink max_tile_pixels if C grows to hundreds.
    if HW <= max_tile_pixels:
        tile_p = HW
    else:
        tile_p = max_tile_pixels - (max_tile_pixels % 128)
    grid = (N, pl.cdiv(HW, tile_p))

    cost = pl.CostEstimate(
        flops=2 * N * HW * C * C,
        transcendentals=0,
        bytes_accessed=2 * N * C * HW * x_nchw.dtype.itemsize,
    )

    out3 = pl.pallas_call(
        vp_eps_kernel,
        out_shape=jax.ShapeDtypeStruct((N, C, HW), dtype),
        grid=grid,
        in_specs=[
            pl.BlockSpec(memory_space=pltpu.MemorySpace.SMEM),       # coeff (C, C)
            pl.BlockSpec(memory_space=pltpu.MemorySpace.SMEM),       # bias2 (C,)
            pl.BlockSpec((1, C, tile_p), lambda n, p: (n, 0, p)),    # x pixels
        ],
        out_specs=pl.BlockSpec((1, C, tile_p), lambda n, p: (n, 0, p)),
        compiler_params=pltpu.CompilerParams(
            dimension_semantics=("parallel", "parallel")),
        cost_estimate=cost,
    )(coeff, bias2, x3)

    return out3.reshape(N, C, H, W)


# ----------------------------------------------------------------------------
# Pure-JAX reference (for verification; mirrors the PyTorch forward)
# ----------------------------------------------------------------------------
def vp_epsilon_reference(x_nchw, t, alphas_cumprod, w, b, sigma_data=0.5):
    alpha_t = alphas_cumprod.astype(jnp.float32)[t]
    eq_sigma = jnp.sqrt((1.0 - alpha_t) / alpha_t)
    ve = x_nchw.astype(jnp.float32) / jnp.sqrt(alpha_t)

    s2 = eq_sigma * eq_sigma
    d2 = jnp.float32(sigma_data * sigma_data)
    c_skip = d2 / (s2 + d2)
    c_out = eq_sigma * sigma_data / jnp.sqrt(s2 + d2)
    c_in = 1.0 / jnp.sqrt(s2 + d2)

    ve_nhwc = jnp.transpose(ve, (0, 2, 3, 1))
    h = jnp.einsum('nhwc,cd->nhwd', c_in * ve_nhwc, w) + b.reshape(1, 1, 1, -1)
    den_nhwc = c_skip * ve_nhwc + c_out * h
    den = jnp.transpose(den_nhwc, (0, 3, 1, 2))
    return ((ve - den) / eq_sigma).astype(x_nchw.dtype)


# ----------------------------------------------------------------------------
if __name__ == "__main__":
    key = jax.random.PRNGKey(0)
    kx, kw, kb = jax.random.split(key, 3)

    N, C, H, W = 2, 4, 16, 16
    timesteps = 100
    t = 37  # int timestep, matching the PyTorch `isinstance(t, int)` branch

    x = jax.random.normal(kx, (N, C, H, W), dtype=jnp.float32)
    w = 0.1 * jax.random.normal(kw, (C, C), dtype=jnp.float32)      # 1x1 conv weight
    b = 0.05 * jax.random.normal(kb, (C,), dtype=jnp.float32)       # 1x1 conv bias

    # linear-beta VP schedule -> alphas_cumprod (deterministic)
    betas = jnp.linspace(1e-4, 2e-2, timesteps, dtype=jnp.float32)
    alphas_cumprod = jnp.cumprod(1.0 - betas)

    eps = vp_epsilon_from_denoiser(x, t, alphas_cumprod, w, b)
    eps = jax.block_until_ready(eps)

    ref = vp_epsilon_reference(x, t, alphas_cumprod, w, b)
    assert eps.shape == x.shape and eps.dtype == x.dtype
    assert jnp.max(jnp.abs(eps - ref)) < 1e-3, "mismatch vs reference"

    print("KERNEL_OK")
</pallas_src>

<mosaic_0001>
module attributes {stable_mosaic.version = 11 : i64} {
  func.func @vp_eps_kernel(%arg0: i32, %arg1: i32, %arg2: memref<4x4xf32, #tpu.memory_space<smem>>, %arg3: memref<4xf32, #tpu.memory_space<smem>>, %arg4: memref<1x4x256xf32, #tpu.memory_space<vmem>>, %arg5: memref<1x4x256xf32, #tpu.memory_space<vmem>>) attributes {dimension_semantics = [#tpu.dimension_semantics<parallel>, #tpu.dimension_semantics<parallel>], iteration_bounds = array<i64: 2, 1>, scalar_prefetch = 0 : i64, scratch_operands = 0 : i64, tpu.core_type = #tpu.core_type<tc>, window_params = [{transform_indices = @transform_0, window_bounds = array<i64: 4, 4>}, {transform_indices = @transform_1, window_bounds = array<i64: 4>}, {transform_indices = @transform_2, window_bounds = array<i64: 1, 4, 256>}, {transform_indices = @transform_3, window_bounds = array<i64: 1, 4, 256>}]} {
    %c0 = arith.constant 0 : index
    %c0_0 = arith.constant 0 : index
    %c0_1 = arith.constant 0 : index
    %0 = vector.load %arg4[%c0, %c0_0, %c0_1] : memref<1x4x256xf32, #tpu.memory_space<vmem>>, vector<1x4x256xf32>
    %1 = vector.shape_cast %0 : vector<1x4x256xf32> to vector<4x256xf32>
    %2 = vector.extract_strided_slice %1 {offsets = [0, 0], sizes = [1, 256], strides = [1, 1]} : vector<4x256xf32> to vector<1x256xf32>
    %c0_2 = arith.constant 0 : index
    %c0_3 = arith.constant 0 : index
    %3 = memref.load %arg2[%c0_2, %c0_3] : memref<4x4xf32, #tpu.memory_space<smem>>
    %4 = vector.broadcast %3 : f32 to vector<1x256xf32>
    %5 = arith.mulf %2, %4 : vector<1x256xf32>
    %6 = vector.extract_strided_slice %1 {offsets = [1, 0], sizes = [1, 256], strides = [1, 1]} : vector<4x256xf32> to vector<1x256xf32>
    %c1 = arith.constant 1 : index
    %c0_4 = arith.constant 0 : index
    %7 = memref.load %arg2[%c1, %c0_4] : memref<4x4xf32, #tpu.memory_space<smem>>
    %8 = vector.broadcast %7 : f32 to vector<1x256xf32>
    %9 = arith.mulf %6, %8 : vector<1x256xf32>
    %10 = arith.addf %5, %9 : vector<1x256xf32>
    %11 = vector.extract_strided_slice %1 {offsets = [2, 0], sizes = [1, 256], strides = [1, 1]} : vector<4x256xf32> to vector<1x256xf32>
    %c2 = arith.constant 2 : index
    %c0_5 = arith.constant 0 : index
    %12 = memref.load %arg2[%c2, %c0_5] : memref<4x4xf32, #tpu.memory_space<smem>>
    %13 = vector.broadcast %12 : f32 to vector<1x256xf32>
    %14 = arith.mulf %11, %13 : vector<1x256xf32>
    %15 = arith.addf %10, %14 : vector<1x256xf32>
    %16 = vector.extract_strided_slice %1 {offsets = [3, 0], sizes = [1, 256], strides = [1, 1]} : vector<4x256xf32> to vector<1x256xf32>
    %c3 = arith.constant 3 : index
    %c0_6 = arith.constant 0 : index
    %17 = memref.load %arg2[%c3, %c0_6] : memref<4x4xf32, #tpu.memory_space<smem>>
    %18 = vector.broadcast %17 : f32 to vector<1x256xf32>
    %19 = arith.mulf %16, %18 : vector<1x256xf32>
    %20 = arith.addf %15, %19 : vector<1x256xf32>
    %c0_7 = arith.constant 0 : index
    %21 = memref.load %arg3[%c0_7] : memref<4xf32, #tpu.memory_space<smem>>
    %22 = vector.broadcast %21 : f32 to vector<1x256xf32>
    %23 = arith.addf %20, %22 : vector<1x256xf32>
    %24 = vector.extract_strided_slice %1 {offsets = [0, 0], sizes = [1, 256], strides = [1, 1]} : vector<4x256xf32> to vector<1x256xf32>
    %c0_8 = arith.constant 0 : index
    %c1_9 = arith.constant 1 : index
    %25 = memref.load %arg2[%c0_8, %c1_9] : memref<4x4xf32, #tpu.memory_space<smem>>
    %26 = vector.broadcast %25 : f32 to vector<1x256xf32>
    %27 = arith.mulf %24, %26 : vector<1x256xf32>
    %28 = vector.extract_strided_slice %1 {offsets = [1, 0], sizes = [1, 256], strides = [1, 1]} : vector<4x256xf32> to vector<1x256xf32>
    %c1_10 = arith.constant 1 : index
    %c1_11 = arith.constant 1 : index
    %29 = memref.load %arg2[%c1_10, %c1_11] : memref<4x4xf32, #tpu.memory_space<smem>>
    %30 = vector.broadcast %29 : f32 to vector<1x256xf32>
    %31 = arith.mulf %28, %30 : vector<1x256xf32>
    %32 = arith.addf %27, %31 : vector<1x256xf32>
    %33 = vector.extract_strided_slice %1 {offsets = [2, 0], sizes = [1, 256], strides = [1, 1]} : vector<4x256xf32> to vector<1x256xf32>
    %c2_12 = arith.constant 2 : index
    %c1_13 = arith.constant 1 : index
    %34 = memref.load %arg2[%c2_12, %c1_13] : memref<4x4xf32, #tpu.memory_space<smem>>
    %35 = vector.broadcast %34 : f32 to vector<1x256xf32>
    %36 = arith.mulf %33, %35 : vector<1x256xf32>
    %37 = arith.addf %32, %36 : vector<1x256xf32>
    %38 = vector.extract_strided_slice %1 {offsets = [3, 0], sizes = [1, 256], strides = [1, 1]} : vector<4x256xf32> to vector<1x256xf32>
    %c3_14 = arith.constant 3 : index
    %c1_15 = arith.constant 1 : index
    %39 = memref.load %arg2[%c3_14, %c1_15] : memref<4x4xf32, #tpu.memory_space<smem>>
    %40 = vector.broadcast %39 : f32 to vector<1x256xf32>
    %41 = arith.mulf %38, %40 : vector<1x256xf32>
    %42 = arith.addf %37, %41 : vector<1x256xf32>
    %c1_16 = arith.constant 1 : index
    %43 = memref.load %arg3[%c1_16] : memref<4xf32, #tpu.memory_space<smem>>
    %44 = vector.broadcast %43 : f32 to vector<1x256xf32>
    %45 = arith.addf %42, %44 : vector<1x256xf32>
    %46 = vector.extract_strided_slice %1 {offsets = [0, 0], sizes = [1, 256], strides = [1, 1]} : vector<4x256xf32> to vector<1x256xf32>
    %c0_17 = arith.constant 0 : index
    %c2_18 = arith.constant 2 : index
    %47 = memref.load %arg2[%c0_17, %c2_18] : memref<4x4xf32, #tpu.memory_space<smem>>
    %48 = vector.broadcast %47 : f32 to vector<1x256xf32>
    %49 = arith.mulf %46, %48 : vector<1x256xf32>
    %50 = vector.extract_strided_slice %1 {offsets = [1, 0], sizes = [1, 256], strides = [1, 1]} : vector<4x256xf32> to vector<1x256xf32>
    %c1_19 = arith.constant 1 : index
    %c2_20 = arith.constant 2 : index
    %51 = memref.load %arg2[%c1_19, %c2_20] : memref<4x4xf32, #tpu.memory_space<smem>>
    %52 = vector.broadcast %51 : f32 to vector<1x256xf32>
    %53 = arith.mulf %50, %52 : vector<1x256xf32>
    %54 = arith.addf %49, %53 : vector<1x256xf32>
    %55 = vector.extract_strided_slice %1 {offsets = [2, 0], sizes = [1, 256], strides = [1, 1]} : vector<4x256xf32> to vector<1x256xf32>
    %c2_21 = arith.constant 2 : index
    %c2_22 = arith.constant 2 : index
    %56 = memref.load %arg2[%c2_21, %c2_22] : memref<4x4xf32, #tpu.memory_space<smem>>
    %57 = vector.broadcast %56 : f32 to vector<1x256xf32>
    %58 = arith.mulf %55, %57 : vector<1x256xf32>
    %59 = arith.addf %54, %58 : vector<1x256xf32>
    %60 = vector.extract_strided_slice %1 {offsets = [3, 0], sizes = [1, 256], strides = [1, 1]} : vector<4x256xf32> to vector<1x256xf32>
    %c3_23 = arith.constant 3 : index
    %c2_24 = arith.constant 2 : index
    %61 = memref.load %arg2[%c3_23, %c2_24] : memref<4x4xf32, #tpu.memory_space<smem>>
    %62 = vector.broadcast %61 : f32 to vector<1x256xf32>
    %63 = arith.mulf %60, %62 : vector<1x256xf32>
    %64 = arith.addf %59, %63 : vector<1x256xf32>
    %c2_25 = arith.constant 2 : index
    %65 = memref.load %arg3[%c2_25] : memref<4xf32, #tpu.memory_space<smem>>
    %66 = vector.broadcast %65 : f32 to vector<1x256xf32>
    %67 = arith.addf %64, %66 : vector<1x256xf32>
    %68 = vector.extract_strided_slice %1 {offsets = [0, 0], sizes = [1, 256], strides = [1, 1]} : vector<4x256xf32> to vector<1x256xf32>
    %c0_26 = arith.constant 0 : index
    %c3_27 = arith.constant 3 : index
    %69 = memref.load %arg2[%c0_26, %c3_27] : memref<4x4xf32, #tpu.memory_space<smem>>
    %70 = vector.broadcast %69 : f32 to vector<1x256xf32>
    %71 = arith.mulf %68, %70 : vector<1x256xf32>
    %72 = vector.extract_strided_slice %1 {offsets = [1, 0], sizes = [1, 256], strides = [1, 1]} : vector<4x256xf32> to vector<1x256xf32>
    %c1_28 = arith.constant 1 : index
    %c3_29 = arith.constant 3 : index
    %73 = memref.load %arg2[%c1_28, %c3_29] : memref<4x4xf32, #tpu.memory_space<smem>>
    %74 = vector.broadcast %73 : f32 to vector<1x256xf32>
    %75 = arith.mulf %72, %74 : vector<1x256xf32>
    %76 = arith.addf %71, %75 : vector<1x256xf32>
    %77 = vector.extract_strided_slice %1 {offsets = [2, 0], sizes = [1, 256], strides = [1, 1]} : vector<4x256xf32> to vector<1x256xf32>
    %c2_30 = arith.constant 2 : index
    %c3_31 = arith.constant 3 : index
    %78 = memref.load %arg2[%c2_30, %c3_31] : memref<4x4xf32, #tpu.memory_space<smem>>
    %79 = vector.broadcast %78 : f32 to vector<1x256xf32>
    %80 = arith.mulf %77, %79 : vector<1x256xf32>
    %81 = arith.addf %76, %80 : vector<1x256xf32>
    %82 = vector.extract_strided_slice %1 {offsets = [3, 0], sizes = [1, 256], strides = [1, 1]} : vector<4x256xf32> to vector<1x256xf32>
    %c3_32 = arith.constant 3 : index
    %c3_33 = arith.constant 3 : index
    %83 = memref.load %arg2[%c3_32, %c3_33] : memref<4x4xf32, #tpu.memory_space<smem>>
    %84 = vector.broadcast %83 : f32 to vector<1x256xf32>
    %85 = arith.mulf %82, %84 : vector<1x256xf32>
    %86 = arith.addf %81, %85 : vector<1x256xf32>
    %c3_34 = arith.constant 3 : index
    %87 = memref.load %arg3[%c3_34] : memref<4xf32, #tpu.memory_space<smem>>
    %88 = vector.broadcast %87 : f32 to vector<1x256xf32>
    %89 = arith.addf %86, %88 : vector<1x256xf32>
    %90 = tpu.concatenate %23, %45, %67, %89 in 0 : vector<1x256xf32>, vector<1x256xf32>, vector<1x256xf32>, vector<1x256xf32> -> vector<4x256xf32>
    %c0_35 = arith.constant 0 : index
    %c0_36 = arith.constant 0 : index
    %c0_37 = arith.constant 0 : index
    %91 = vector.load %arg5[%c0_35, %c0_36, %c0_37] : memref<1x4x256xf32, #tpu.memory_space<vmem>>, vector<1x4x256xf32>
    %92 = vector.shape_cast %91 : vector<1x4x256xf32> to vector<4x256xf32>
    %93 = vector.shape_cast %90 : vector<4x256xf32> to vector<1x4x256xf32>
    tpu.vector_store %arg5[%c0_35, %c0_36, %c0_37], %93 {strides = array<i32>} : memref<1x4x256xf32, #tpu.memory_space<vmem>>, vector<1x4x256xf32>,
    return
  }
  func.func @transform_0(%arg0: i32, %arg1: i32) -> (i32, i32) {
    %c0_i32 = arith.constant 0 : i32
    %c0_i32_0 = arith.constant 0 : i32
    %c0_i32_1 = arith.constant 0 : i32
    return %c0_i32, %c0_i32_0 : i32, i32
  }
  func.func @transform_1(%arg0: i32, %arg1: i32) -> i32 {
    %c0_i32 = arith.constant 0 : i32
    %c0_i32_0 = arith.constant 0 : i32
    return %c0_i32 : i32
  }
  func.func @transform_2(%arg0: i32, %arg1: i32) -> (i32, i32, i32) {
    %c0_i32 = arith.constant 0 : i32
    %c0_i32_0 = arith.constant 0 : i32
    return %arg0, %c0_i32, %arg1 : i32, i32, i32
  }
  func.func @transform_3(%arg0: i32, %arg1: i32) -> (i32, i32, i32) {
    %c0_i32 = arith.constant 0 : i32
    %c0_i32_0 = arith.constant 0 : i32
    return %arg0, %c0_i32, %arg1 : i32, i32, i32
  }
}

</mosaic_0001>

<llo_original>
// kernel: tpu_custom_call.1
$region0: #{tpu_custom_call.1}
  #allocation0 [shape = 'u32[]', space=smem, size = 0x4, offset = 0x4, fixed_abs, tag = 'smem constant byte address 0x4 - core index']
  #allocation1 [shape = 'u32[72,128]{1,0:T(1,128)}', space=vmem, size = 0x9000, scoped, tag = 'internal scratch']
  %s0 = inlined_call_operand.hbm [shape: f32[4,4], index: 0, kind: input, shape index: {}]
  %s1 = inlined_call_operand.hbm [shape: f32[4], index: 1, kind: input, shape index: {}]
  %s2 = inlined_call_operand.hbm [shape: f32[2,4,256], index: 2, kind: input, shape index: {}]
  %s3 = inlined_call_operand.hbm [shape: f32[2,4,256], index: 3, kind: output, shape index: {}]
  %s4 = sld [smem:[#allocation0]]
  $region57: #{tpu_custom_call.1} parent=0
    _
  %s6 = ssub.s32 1, %s4
  %s7 = scalar_select 0, %s6, %s4
  $region1: #{tpu_custom_call.1} parent=0
    #allocation2 [shape = 'u8[2048]{0}', space=smem, size = 0x800, scoped, tag = 'input window, operand 0, single buffered']
    #allocation3 [shape = 's32[2]{0}', space=sflag, size = 0x8, scoped, tag = 'scoped memory for tpu_custom_call.1']
    #allocation4 [shape = 's32[2]{0}', space=sflag, size = 0x8, scoped, tag = 'scoped memory for tpu_custom_call.1']
    #allocation5 [shape = 's32[2]{0}', space=sflag, size = 0x8, scoped, tag = 'scoped memory for tpu_custom_call.1']
    #allocation6 [shape = 'u8[512]{0}', space=smem, size = 0x200, scoped, tag = 'input window, operand 1, single buffered']
    #allocation7 [shape = 's32[1]{0}', space=sflag, size = 0x4, scoped, tag = 'scoped memory for tpu_custom_call.1']
    #allocation8 [shape = 'u8[8192]{0}', space=vmem, size = 0x2000, scoped, tag = 'input window, operand 2']
    #allocation9 [shape = 'u8[8192]{0}', space=vmem, size = 0x2000, scoped, tag = 'output window, operand 0']
    %8 = vsyncpa [#allocation5], 0
    %9 = vsyncpa [#allocation7], 0
    %10 = vsyncpa [#allocation3], 0
    %s11 = scalar_lea.sflag [#allocation3], 1
    %12 = vsyncpa %s11, 0
    %13 = vsyncpa [#allocation4], 0
    %s14 = scalar_lea.sflag [#allocation4], 1
    %15 = vsyncpa %s14, 0
    loop: start=0, step=1, limit=4
    $region2: #{tpu_custom_call.1} parent=1 // loop_pre_header
      _
    $region3: #{tpu_custom_call.1} parent=1 // loop_header
      %s17 = sphi 0, %s21
      %p18 = scmp.ge.s32.totalorder %s17, 4
      %s24 = sphi 0, %s36
      %s25 = sphi 0, %s32
      %s26 = sphi 0, %s24
      %s27 = sphi 0, %s25
      %s28 = sphi 0, %s26
      %s29 = sphi 0, %s27
      %s37 = sphi 0, %s37
      %s39 = sphi 0, %s37
      %s40 = sphi 0, %s39
      %s54 = sphi 0, %s40
      %s58 = sphi 0, %s58
      %s60 = sphi 0, %s58
      %s61 = sphi 0, %s60
      %s75 = sphi 0, %s61
      %s83 = sphi 0, %s85
      %s86 = sphi 0, %s83
      %s87 = sphi 0, %s86
      %s103 = sphi 0, %s87
      %s111 = sphi 0, %s113
      %s114 = sphi 0, %s111
      %s115 = sphi 0, %s114
      %s131 = sphi 0, %s115
    $region4: #{tpu_custom_call.1} parent=1 // loop_header_branch
      %20 = sbr.rel (%p18) target = $region8
    $region5: #{tpu_custom_call.1} parent=1 // loop_body
      %s22 = ssub.s32 %s17, 1
      %s23 = ssub.s32 %s17, 2
      %s30 = sadd.s32 1, %s25
      %p31 = scmp.ge.s32.totalorder %s30, 1
      %s32 = scalar_select %p31, 0, %s30
      %s33 = sadd.s32 1, %s24
      %s34 = scalar_select %p31, %s33, %s24
      %p35 = scmp.ge.s32.totalorder %s34, 2
      %s36 = scalar_select %p35, 0, %s34
      %s38 = sadd.s32 %s37, 1
      %p41 = scmp.eq.s32.totalorder %s17, 1
      %p42 = scmp.ne.s32.totalorder %s37, %s39
      %p43 = scmp.eq.s32.totalorder %s17, 0
      %p44 = por %p42, %p43
      %p45 = scmp.ne.s32.totalorder %s37, %s39
      %p46 = scmp.eq.s32.totalorder %s22, 1
      %p47 = por %p45, %p46
      %p48 = scmp.ne.s32.totalorder %s39, %s40
      %p49 = scmp.eq.s32.totalorder %s22, 0
      %p50 = por %p48, %p49
      %p51 = scmp.ne.s32.totalorder %s39, %s40
      %p52 = scmp.eq.s32.totalorder %s23, 1
      %p53 = por %p51, %p52
      %p55 = scmp.ne.s32.totalorder %s40, %s54
      %p56 = scmp.eq.s32.totalorder %s23, 0
      %p57 = por %p55, %p56
      %s59 = sadd.s32 %s58, 1
      %p62 = scmp.eq.s32.totalorder %s17, 1
      %p63 = scmp.ne.s32.totalorder %s58, %s60
      %p64 = scmp.eq.s32.totalorder %s17, 0
      %p65 = por %p63, %p64
      %p66 = scmp.ne.s32.totalorder %s58, %s60
      %p67 = scmp.eq.s32.totalorder %s22, 1
      %p68 = por %p66, %p67
      %p69 = scmp.ne.s32.totalorder %s60, %s61
      %p70 = scmp.eq.s32.totalorder %s22, 0
      %p71 = por %p69, %p70
      %p72 = scmp.ne.s32.totalorder %s60, %s61
      %p73 = scmp.eq.s32.totalorder %s23, 1
      %p74 = por %p72, %p73
      %p76 = scmp.ne.s32.totalorder %s61, %s75
      %p77 = scmp.eq.s32.totalorder %s23, 0
      %p78 = por %p76, %p77
      %s79 = ssub.s32 %s24, %s36
      %s80 = ssub.s32 %s25, %s32
      %s81 = sor.u32 %s79, %s80
      %p82 = scmp.eq.s32.totalorder %s81, 0
      %s84 = sadd.s32 %s83, 1
      %s85 = scalar_select %p82, %s83, %s84
      %p88 = pneg %p82
      %p89 = scmp.eq.s32.totalorder %s17, 1
      %p90 = por %p88, %p89
      %p91 = scmp.ne.s32.totalorder %s83, %s86
      %p92 = scmp.eq.s32.totalorder %s17, 0
      %p93 = por %p91, %p92
      %p94 = scmp.ne.s32.totalorder %s83, %s86
      %p95 = scmp.eq.s32.totalorder %s22, 1
      %p96 = por %p94, %p95
      %p97 = scmp.ne.s32.totalorder %s86, %s87
      %p98 = scmp.eq.s32.totalorder %s22, 0
      %p99 = por %p97, %p98
      %p100 = scmp.ne.s32.totalorder %s86, %s87
      %p101 = scmp.eq.s32.totalorder %s23, 1
      %p102 = por %p100, %p101
      %p104 = scmp.ne.s32.totalorder %s87, %s103
      %p105 = scmp.eq.s32.totalorder %s23, 0
      %p106 = por %p104, %p105
      %s107 = ssub.s32 %s24, %s36
      %s108 = ssub.s32 %s25, %s32
      %s109 = sor.u32 %s107, %s108
      %p110 = scmp.eq.s32.totalorder %s109, 0
      %s112 = sadd.s32 %s111, 1
      %s113 = scalar_select %p110, %s111, %s112
      %p116 = pneg %p110
      %p117 = scmp.eq.s32.totalorder %s17, 1
      %p118 = por %p116, %p117
      %p119 = scmp.ne.s32.totalorder %s111, %s114
      %p120 = scmp.eq.s32.totalorder %s17, 0
      %p121 = por %p119, %p120
      %p122 = scmp.ne.s32.totalorder %s111, %s114
      %p123 = scmp.eq.s32.totalorder %s22, 1
      %p124 = por %p122, %p123
      %p125 = scmp.ne.s32.totalorder %s114, %s115
      %p126 = scmp.eq.s32.totalorder %s22, 0
      %p127 = por %p125, %p126
      %p128 = scmp.ne.s32.totalorder %s114, %s115
      %p129 = scmp.eq.s32.totalorder %s23, 1
      %p130 = por %p128, %p129
      %p132 = scmp.ne.s32.totalorder %s115, %s131
      %p133 = scmp.eq.s32.totalorder %s23, 0
      %p134 = por %p132, %p133
      %p135 = scmp.le.s32.totalorder 1, %s17
      %p136 = scmp.lt.s32.totalorder %s17, 3
      %p137 = pnand %p135, %p136
      %p138 = pneg %p137
      // Predicated region
      $region9: #{tpu_custom_call.1} parent=5 // pred_check
        _
      $region10: #{tpu_custom_call.1} parent=5 // pred_check_branch
        %140 = sbr.rel (%p137) target = $region12
      $region11: #{tpu_custom_call.1} parent=5 // pred_region
        %s141 = ssub.s32 %s17, 1
        // Predicated region
        $region13: #{tpu_custom_call.1} parent=11 // pred_check
          %p142 = pneg %p50
        $region14: #{tpu_custom_call.1} parent=11 // pred_check_branch
          %144 = sbr.rel (%p142) target = $region16
        $region15: #{tpu_custom_call.1} parent=11 // pred_region
          %146 = vsyncadd [#allocation5], 0
          %s148 = sshll.u32 %s0, 4
          %s149 = int_to_ptr.hbm [resolvable:$true] %s148
          %151 = dma.hbm_to_smem %s149, 64, [#allocation2], [#allocation5]
        $region16: #{tpu_custom_call.1} parent=11 // pred_fallthru
          _
        // Predicated region
        $region17: #{tpu_custom_call.1} parent=11 // pred_check
          %p152 = pneg %p71
        $region18: #{tpu_custom_call.1} parent=11 // pred_check_branch
          %154 = sbr.rel (%p152) target = $region20
        $region19: #{tpu_custom_call.1} parent=11 // pred_region
          %156 = vsyncadd [#allocation7], 0
          %s158 = sshll.u32 %s1, 4
          %s159 = int_to_ptr.hbm [resolvable:$true] %s158
          %161 = dma.hbm_to_smem %s159, 16, [#allocation6], [#allocation7]
        $region20: #{tpu_custom_call.1} parent=11 // pred_fallthru
          _
      $region12: #{tpu_custom_call.1} parent=5 // pred_fallthru
        _
      %p162 = scmp.lt.s32.totalorder %s17, 2
      // Predicated region
      $region21: #{tpu_custom_call.1} parent=5 // pred_check
        %p163 = pneg %p162
      $region22: #{tpu_custom_call.1} parent=5 // pred_check_branch
        %165 = sbr.rel (%p163) target = $region24
      $region23: #{tpu_custom_call.1} parent=5 // pred_region
        // Predicated region
        $region25: #{tpu_custom_call.1} parent=23 // pred_check
          %p166 = pneg %p93
        $region26: #{tpu_custom_call.1} parent=23 // pred_check_branch
          %168 = sbr.rel (%p166) target = $region28
        $region27: #{tpu_custom_call.1} parent=23 // pred_region
          %s169 = sand.u32 %s83, 1
          %s170 = scalar_lea.sflag [#allocation3], %s169
          %s171 = sand.u32 %s83, 1
          %s172 = smul.addr %s171, 8
          %s173 = scalar_lea.vmem [#allocation8], %s172
          %s174 = smul.u32 2, %s25
          %176 = vsyncadd %s170, 0
          %s177 = smul.addr %s24, 2
          %s178 = sadd.s32 %s174, %s177
          %s179 = smul.addr %s178, 4
          %s180 = scalar_lea.hbm %s2, %s179
          %s182 = sshll.u32 %s180, 4
          %s183 = int_to_ptr.hbm [resolvable:$true] %s182
          %s184 = sshll.u32 %s173, 4
          %s185 = int_to_ptr.vmem [resolvable:$true] %s184
          %187 = dma.hbm_to_vmem [thread:$0]  %s183, 128, %s185, %s170
        $region28: #{tpu_custom_call.1} parent=23 // pred_fallthru
          _
      $region24: #{tpu_custom_call.1} parent=5 // pred_fallthru
        _
      %p188 = scmp.le.s32.totalorder 1, %s17
      %p189 = scmp.lt.s32.totalorder %s17, 3
      %p190 = pnand %p188, %p189
      %p191 = pneg %p190
      // Predicated region
      $region29: #{tpu_custom_call.1} parent=5 // pred_check
        _
      $region30: #{tpu_custom_call.1} parent=5 // pred_check_branch
        %193 = sbr.rel (%p190) target = $region32
      $region31: #{tpu_custom_call.1} parent=5 // pred_region
        %s194 = ssub.s32 %s17, 1
        // Predicated region
        $region33: #{tpu_custom_call.1} parent=31 // pred_check
          %p195 = pneg %p50
        $region34: #{tpu_custom_call.1} parent=31 // pred_check_branch
          %197 = sbr.rel (%p195) target = $region36
        $region35: #{tpu_custom_call.1} parent=31 // pred_region
          %199 = dma.done [#allocation5], 64
        $region36: #{tpu_custom_call.1} parent=31 // pred_fallthru
          _
        // Predicated region
        $region37: #{tpu_custom_call.1} parent=31 // pred_check
          %p200 = pneg %p71
        $region38: #{tpu_custom_call.1} parent=31 // pred_check_branch
          %202 = sbr.rel (%p200) target = $region40
        $region39: #{tpu_custom_call.1} parent=31 // pred_region
          %204 = dma.done [#allocation7], 16
        $region40: #{tpu_custom_call.1} parent=31 // pred_fallthru
          _
        %s205 = sand.u32 %s86, 1
        %s206 = scalar_lea.sflag [#allocation3], %s205
        %s207 = sand.u32 %s86, 1
        %s208 = smul.addr %s207, 8
        %s209 = scalar_lea.vmem [#allocation8], %s208
        // Predicated region
        $region41: #{tpu_custom_call.1} parent=31 // pred_check
          %p210 = pneg %p99
        $region42: #{tpu_custom_call.1} parent=31 // pred_check_branch
          %212 = sbr.rel (%p210) target = $region44
        $region43: #{tpu_custom_call.1} parent=31 // pred_region
          %214 = dma.done %s206, 128
        $region44: #{tpu_custom_call.1} parent=31 // pred_fallthru
          _
        %215 = sfence
        %p216 = pneg %p50
        %p217 = pneg %p47
        %p218 = pneg %p71
        %p219 = pneg %p68
        %s220 = sand.u32 %s86, 1
        %s221 = scalar_lea.sflag [#allocation3], %s220
        %s222 = sand.u32 %s86, 1
        %s223 = smul.addr %s222, 8
        %s224 = scalar_lea.vmem [#allocation8], %s223
        %p225 = pneg %p99
        %p226 = pneg %p96
        %p227 = pneg %p127
        %p228 = pneg %p124
        %s229 = sand.u32 %s114, 1
        %s230 = scalar_lea.sflag [#allocation4], %s229
        %s231 = sand.u32 %s114, 1
        %s232 = smul.addr %s231, 8
        %s233 = scalar_lea.vmem [#allocation9], %s232
        %s234 = smul.u32 2, %s27
        %s235 = smul.u32 2, %s27
        %v236 = vld [vmem:[%s209] sm:$0xff]
        %s237 = sld [smem:[#allocation2]]
        %v238 = vstv %s237
        %v239 = vmul.f32 %v236, %v238
        %s240 = sld [smem:[#allocation2 + $0x80]]
        %v241 = vstv %s240
        %v242 = vmul.f32 %v236, %v241
        %v244 = vrot.slane %v242, 5
        %v245 = vrot.slane %v244, 4
        %v247 = vadd.f32 %v239, %v245
        %s248 = sld [smem:[#allocation2 + $0x100]]
        %v249 = vstv %s248
        %v250 = vmul.f32 %v236, %v249
        %v252 = vrot.slane %v250, 6
        %v253 = vrot.slane %v252, 4
        %v255 = vadd.f32 %v247, %v253
        %s256 = sld [smem:[#allocation2 + $0x180]]
        %v257 = vstv %s256
        %v258 = vmul.f32 %v236, %v257
        %v260 = vrot.slane %v258, 7
        %v261 = vrot.slane %v260, 4
        %v263 = vadd.f32 %v255, %v261
        %s264 = sld [smem:[#allocation6]]
        %v265 = vstv %s264
        %v266 = vadd.f32 %v263, %v265
        %s267 = sld [smem:[#allocation2 + $0x1]]
        %v268 = vstv %s267
        %v269 = vmul.f32 %v236, %v268
        %s270 = sld [smem:[#allocation2 + $0x81]]
        %v271 = vstv %s270
        %v272 = vmul.f32 %v236, %v271
        %v274 = vrot.slane %v272, 5
        %v275 = vrot.slane %v274, 4
        %v277 = vadd.f32 %v269, %v275
        %s278 = sld [smem:[#allocation2 + $0x101]]
        %v279 = vstv %s278
        %v280 = vmul.f32 %v236, %v279
        %v282 = vrot.slane %v280, 6
        %v283 = vrot.slane %v282, 4
        %v285 = vadd.f32 %v277, %v283
        %s286 = sld [smem:[#allocation2 + $0x181]]
        %v287 = vstv %s286
        %v288 = vmul.f32 %v236, %v287
        %v290 = vrot.slane %v288, 7
        %v291 = vrot.slane %v290, 4
        %v293 = vadd.f32 %v285, %v291
        %s294 = sld [smem:[#allocation6 + $0x1]]
        %v295 = vstv %s294
        %v296 = vadd.f32 %v293, %v295
        %s297 = sld [smem:[#allocation2 + $0x2]]
        %v298 = vstv %s297
        %v299 = vmul.f32 %v236, %v298
        %s300 = sld [smem:[#allocation2 + $0x82]]
        %v301 = vstv %s300
        %v302 = vmul.f32 %v236, %v301
        %v304 = vrot.slane %v302, 5
        %v305 = vrot.slane %v304, 4
        %v307 = vadd.f32 %v299, %v305
        %s308 = sld [smem:[#allocation2 + $0x102]]
        %v309 = vstv %s308
        %v310 = vmul.f32 %v236, %v309
        %v312 = vrot.slane %v310, 6
        %v313 = vrot.slane %v312, 4
        %v315 = vadd.f32 %v307, %v313
        %s316 = sld [smem:[#allocation2 + $0x182]]
        %v317 = vstv %s316
        %v318 = vmul.f32 %v236, %v317
        %v320 = vrot.slane %v318, 7
        %v321 = vrot.slane %v320, 4
        %v323 = vadd.f32 %v315, %v321
        %s324 = sld [smem:[#allocation6 + $0x2]]
        %v325 = vstv %s324
        %v326 = vadd.f32 %v323, %v325
        %s327 = sld [smem:[#allocation2 + $0x3]]
        %v328 = vstv %s327
        %v329 = vmul.f32 %v236, %v328
        %s330 = sld [smem:[#allocation2 + $0x83]]
        %v331 = vstv %s330
        %v332 = vmul.f32 %v236, %v331
        %v334 = vrot.slane %v332, 5
        %v335 = vrot.slane %v334, 4
        %v337 = vadd.f32 %v329, %v335
        %s338 = sld [smem:[#allocation2 + $0x103]]
        %v339 = vstv %s338
        %v340 = vmul.f32 %v236, %v339
        %v342 = vrot.slane %v340, 6
        %v343 = vrot.slane %v342, 4
        %v345 = vadd.f32 %v337, %v343
        %s346 = sld [smem:[#allocation2 + $0x183]]
        %v347 = vstv %s346
        %v348 = vmul.f32 %v236, %v347
        %v350 = vrot.slane %v348, 7
        %v351 = vrot.slane %v350, 4
        %v353 = vadd.f32 %v345, %v351
        %s354 = sld [smem:[#allocation6 + $0x3]]
        %v355 = vstv %s354
        %v356 = vadd.f32 %v353, %v355
        %v358 = vperm.slane %v266, 0
        %v359 = vperm.slane %v266, 4
        %v363 = vperm.slane %v296, 0
        %v364 = vperm.slane %v296, 4
        %v368 = vperm.slane %v326, 0
        %v369 = vperm.slane %v326, 4
        %v373 = vperm.slane %v356, 0
        %v374 = vperm.slane %v356, 4
        %vm377 = vcmask 1040384
        %v378 = vsel %vm377, %v358, %v363
        %v379 = vsel %vm377, %v359, %v364
        %vm380 = vcmask 1041408
        %v381 = vsel %vm380, %v378, %v368
        %v382 = vsel %vm380, %v379, %v369
        %vm383 = vcmask 1042432
        %v384 = vsel %vm383, %v381, %v373
        %v385 = vsel %vm383, %v382, %v374
        %v388 = vrot.slane %v385, 4
        %vm389 = vcmask 1043456
        %v390 = vsel %vm389, %v384, %v388
        %392 = vst [vmem:[%s233] sm:$0xff] %v390
        %s393 = sand.u32 %s114, 1
        %s394 = scalar_lea.sflag [#allocation4], %s393
        %s395 = sand.u32 %s114, 1
        %s396 = smul.addr %s395, 8
        %s397 = scalar_lea.vmem [#allocation9], %s396
        // Predicated region
        $region45: #{tpu_custom_call.1} parent=31 // pred_check
          %p398 = pneg %p124
        $region46: #{tpu_custom_call.1} parent=31 // pred_check_branch
          %400 = sbr.rel (%p398) target = $region48
        $region47: #{tpu_custom_call.1} parent=31 // pred_region
          %s401 = smul.u32 2, %s27
          %403 = vsyncadd %s394, 0
          %s404 = smul.addr %s26, 2
          %s405 = sadd.s32 %s401, %s404
          %s406 = smul.addr %s405, 4
          %s407 = scalar_lea.hbm %s3, %s406
          %s409 = sshll.u32 %s397, 4
          %s410 = int_to_ptr.vmem [resolvable:$true] %s409
          %s411 = sshll.u32 %s407, 4
          %s412 = int_to_ptr.hbm [resolvable:$true] %s411
          %414 = dma.vmem_to_hbm [thread:$0]  %s410, 128, %s412, %s394
        $region48: #{tpu_custom_call.1} parent=31 // pred_fallthru
          _
      $region32: #{tpu_custom_call.1} parent=5 // pred_fallthru
        _
      %p415 = scmp.le.s32.totalorder 2, %s17
      // Predicated region
      $region49: #{tpu_custom_call.1} parent=5 // pred_check
        %p416 = pneg %p415
      $region50: #{tpu_custom_call.1} parent=5 // pred_check_branch
        %418 = sbr.rel (%p416) target = $region52
      $region51: #{tpu_custom_call.1} parent=5 // pred_region
        %s419 = ssub.s32 %s17, 2
        // Predicated region
        $region53: #{tpu_custom_call.1} parent=51 // pred_check
          %p420 = pneg %p130
        $region54: #{tpu_custom_call.1} parent=51 // pred_check_branch
          %422 = sbr.rel (%p420) target = $region56
        $region55: #{tpu_custom_call.1} parent=51 // pred_region
          %s423 = sand.u32 %s115, 1
          %s424 = scalar_lea.sflag [#allocation4], %s423
          %s425 = sand.u32 %s115, 1
          %s426 = smul.addr %s425, 8
          %s427 = scalar_lea.vmem [#allocation9], %s426
          %429 = dma.done %s424, 128
        $region56: #{tpu_custom_call.1} parent=51 // pred_fallthru
          _
      $region52: #{tpu_custom_call.1} parent=5 // pred_fallthru
        _
    $region6: #{tpu_custom_call.1} parent=1 // loop_footer
      %s21 = sadd.s32 1, %s17
    $region7: #{tpu_custom_call.1} parent=1 // loop_footer_branch
      %16 = sbr.rel target = $region3
    $region8: #{tpu_custom_call.1} parent=1 // loop_exit
      _
    %430 = vsyncpa [#allocation3], 1
    %s431 = scalar_lea.sflag [#allocation3], 1
    %432 = vsyncpa %s431, 1
    %433 = vsyncpa [#allocation4], 1
    %s434 = scalar_lea.sflag [#allocation4], 1
    %435 = vsyncpa %s434, 1
    %436 = vsyncpa [#allocation5], 1
    %s437 = scalar_lea.sflag [#allocation5], 1
    %438 = vsyncpa %s437, 1
    %439 = vsyncpa [#allocation7], 1

</llo_original>
